<compile_context>
chip_gen: v5e
topology: v5e:2x2
jax: 0.10.0
libtpu: 0.0.40
codegen_flags: <defaults>
</compile_context>

<pallas_src>
import math

import jax
import jax.numpy as jnp
from jax.experimental import pallas as pl
from jax.experimental.pallas import tpu as pltpu


def _round_up(a, b):
    return ((a + b - 1) // b) * b


def _net_kernel(xt_ref, w1_ref, b1_ref, w2_ref, b2_ref, w3_ref, b3_ref,
                wfc_ref, bfc_ref, out_ref):
    # conv1 (1x1) + relu + maxpool(1)  == relu(W1 @ x + b1)
    h = jnp.dot(w1_ref[...], xt_ref[...], preferred_element_type=jnp.float32)
    h = jnp.maximum(h + b1_ref[...], 0.0).astype(jnp.bfloat16)   # (C1, T) bf16
    # conv2 (1x1) + relu + maxpool(1)
    h = jnp.dot(w2_ref[...], h, preferred_element_type=jnp.float32)
    h = jnp.maximum(h + b2_ref[...], 0.0).astype(jnp.bfloat16)   # (C2, T) bf16
    # conv3 (1x1) + relu + maxpool(1)
    h = jnp.dot(w3_ref[...], h, preferred_element_type=jnp.float32)
    h = jnp.maximum(h + b3_ref[...], 0.0).astype(jnp.bfloat16)   # (C3, T) bf16
    # view(-1, C3) + fc1  -> lane-dense (1, TILE_N) output block
    # TODO(synk): for the last few %, the 1-row fc could be a VPU mul +
    # cross-sublane reduce instead of a 1/256-utilized MXU op.
    y = jnp.dot(wfc_ref[...], h, preferred_element_type=jnp.float32)
    out_ref[...] = y + bfc_ref[...]


def net_forward(x, params, *, tile_n_max=32768, small_batch=1024):
    """Forward pass of `Net`.

    x: (N, C0) or (N, C0, 1, 1) float32.  Returns (N, 1) float32.
    """
    (w1, b1), (w2, b2), (w3, b3), (wfc, bfc) = params
    n = x.shape[0]
    x2 = x.reshape(n, -1)                 # squeeze the trivial 1x1 spatial dims
    c0 = x2.shape[1]

    if n <= small_batch:
        # Tiny-batch fast path: one full-array block, no padding, no tiling.
        num_tiles, tile_n, n_pad = 1, n, n
    else:
        # Large-N path: big tiles (amortize ~0.35 us/step overhead), but at
        # least 2 tiles so the "parallel" axis feeds both TensorCores on v7x.
        num_tiles = max(2, pl.cdiv(n, tile_n_max))
        tile_n = _round_up(pl.cdiv(n, num_tiles), 256)
        n_pad = num_tiles * tile_n

    # Cast to bf16 BEFORE pad/transpose (halves the bytes of that pass); with
    # allow_input_fusion XLA may fold this producer into the pallas_call input
    # entirely.  Padded batch columns compute relu(b) garbage that is sliced
    # off below (harmless: nothing reduces over the lane/batch axis in-kernel).
    xt = jnp.pad(x2.astype(jnp.bfloat16), ((0, n_pad - n), (0, 0))).T  # (C0, n_pad)
    w1b, w2b, w3b, wfcb = (w.astype(jnp.bfloat16) for w in (w1, w2, w3, wfc))

    const = lambda i: (0, 0)
    out = pl.pallas_call(
        _net_kernel,
        out_shape=jax.ShapeDtypeStruct((1, n_pad), jnp.float32),
        grid=(num_tiles,),
        in_specs=[
            pl.BlockSpec((c0, tile_n), lambda i: (0, i)),   # x tile (pipelined)
            pl.BlockSpec(w1b.shape, const),                 # weights/biases stay
            pl.BlockSpec(b1.shape, const),                  # VMEM-resident across
            pl.BlockSpec(w2b.shape, const),                 # all grid steps
            pl.BlockSpec(b2.shape, const),
            pl.BlockSpec(w3b.shape, const),
            pl.BlockSpec(b3.shape, const),
            pl.BlockSpec(wfcb.shape, const),
            pl.BlockSpec(bfc.shape, const),
        ],
        out_specs=pl.BlockSpec((1, tile_n), lambda i: (0, i)),
        compiler_params=pltpu.CompilerParams(
            dimension_semantics=("parallel",),              # megacore on v7x
            vmem_limit_bytes=48 * 1024 * 1024,              # fits v7x 64 MiB phys
            allow_input_fusion=[True] + [False] * 8,        # fuse x pre-pass
        ),
    )(xt, w1b, b1, w2b, b2, w3b, b3, wfcb, bfc)

    return out[0, :n].reshape(n, 1)


def init_params(key, sizes):
    """Deterministic init. Weights stored as (out, in); biases as (out, 1)."""
    ks = jax.random.split(key, 8)

    def layer(kw, kb, fan_in, fan_out):
        bound = 1.0 / math.sqrt(fan_in)
        w = jax.random.uniform(kw, (fan_out, fan_in), jnp.float32, -bound, bound)
        b = jax.random.uniform(kb, (fan_out, 1), jnp.float32, -bound, bound)
        return w, b

    p1 = layer(ks[0], ks[1], sizes[0], sizes[1])   # conv1: C0 -> C1
    p2 = layer(ks[2], ks[3], sizes[1], sizes[2])   # conv2: C1 -> C2
    p3 = layer(ks[4], ks[5], sizes[2], sizes[3])   # conv3: C2 -> C3
    pf = layer(ks[6], ks[7], sizes[3], 1)          # fc1:   C3 -> 1
    return p1, p2, p3, pf


def reference_forward(x, params):
    """Plain-JAX reference with the same bf16-operand / f32-accumulate math."""
    (w1, b1), (w2, b2), (w3, b3), (wfc, bfc) = params

    def lin(h, w, b):
        return jnp.dot(h, w.astype(jnp.bfloat16).T,
                       preferred_element_type=jnp.float32) + b.T

    h = x.astype(jnp.bfloat16)
    h = jnp.maximum(lin(h, w1, b1), 0.0).astype(jnp.bfloat16)
    h = jnp.maximum(lin(h, w2, b2), 0.0).astype(jnp.bfloat16)
    h = jnp.maximum(lin(h, w3, b3), 0.0).astype(jnp.bfloat16)
    return lin(h, wfc, bfc)


if __name__ == "__main__":
    sizes = [4, 32, 64, 32]           # [C0, C1, C2, C3]

    key = jax.random.PRNGKey(0)
    k_x, k_x2, k_p = jax.random.split(key, 3)
    params = init_params(k_p, sizes)

    # 1) Tiny-batch path (the module's typical call shape), N=8.
    x_small = jax.random.normal(k_x, (8, sizes[0]), jnp.float32)
    x_small_nchw = x_small[:, :, None, None]      # caller-side unsqueeze(-1)x2
    out_small = jax.block_until_ready(net_forward(x_small_nchw, params))
    ref_small = reference_forward(x_small, params)
    assert out_small.shape == (8, 1)
    assert jnp.allclose(out_small, ref_small, atol=2e-3, rtol=2e-3), (
        f"small path: max abs diff = {jnp.max(jnp.abs(out_small - ref_small))}")

    # 2) Tiled path (exercises grid, batch padding, 2-tile megacore split).
    x_big = jax.random.normal(k_x2, (3000, sizes[0]), jnp.float32)
    out_big = jax.block_until_ready(net_forward(x_big[:, :, None, None], params))
    ref_big = reference_forward(x_big, params)
    assert out_big.shape == (3000, 1)
    assert jnp.allclose(out_big, ref_big, atol=2e-3, rtol=2e-3), (
        f"tiled path: max abs diff = {jnp.max(jnp.abs(out_big - ref_big))}")

    print("KERNEL_OK")
</pallas_src>

<mosaic_0001>
module attributes {stable_mosaic.version = 11 : i64} {
  func.func @_net_kernel(%arg0: i32, %arg1: memref<4x8xbf16, #tpu.memory_space<vmem>>, %arg2: memref<32x4xbf16, #tpu.memory_space<vmem>>, %arg3: memref<32x1xf32, #tpu.memory_space<vmem>>, %arg4: memref<64x32xbf16, #tpu.memory_space<vmem>>, %arg5: memref<64x1xf32, #tpu.memory_space<vmem>>, %arg6: memref<32x64xbf16, #tpu.memory_space<vmem>>, %arg7: memref<32x1xf32, #tpu.memory_space<vmem>>, %arg8: memref<1x32xbf16, #tpu.memory_space<vmem>>, %arg9: memref<1x1xf32, #tpu.memory_space<vmem>>, %arg10: memref<1x8xf32, #tpu.memory_space<vmem>>) attributes {dimension_semantics = [#tpu.dimension_semantics<parallel>], iteration_bounds = array<i64: 1>, scalar_prefetch = 0 : i64, scratch_operands = 0 : i64, tpu.core_type = #tpu.core_type<tc>, window_params = [{transform_indices = @transform_0, window_bounds = array<i64: 4, 8>}, {pipeline_mode = #tpu.pipeline_mode<synchronous>, transform_indices = @transform_1, window_bounds = array<i64: 32, 4>}, {pipeline_mode = #tpu.pipeline_mode<synchronous>, transform_indices = @transform_2, window_bounds = array<i64: 32, 1>}, {pipeline_mode = #tpu.pipeline_mode<synchronous>, transform_indices = @transform_3, window_bounds = array<i64: 64, 32>}, {pipeline_mode = #tpu.pipeline_mode<synchronous>, transform_indices = @transform_4, window_bounds = array<i64: 64, 1>}, {pipeline_mode = #tpu.pipeline_mode<synchronous>, transform_indices = @transform_5, window_bounds = array<i64: 32, 64>}, {pipeline_mode = #tpu.pipeline_mode<synchronous>, transform_indices = @transform_6, window_bounds = array<i64: 32, 1>}, {pipeline_mode = #tpu.pipeline_mode<synchronous>, transform_indices = @transform_7, window_bounds = array<i64: 1, 32>}, {pipeline_mode = #tpu.pipeline_mode<synchronous>, transform_indices = @transform_8, window_bounds = array<i64: 1, 1>}, {transform_indices = @transform_9, window_bounds = array<i64: 1, 8>}]} {
    %c0 = arith.constant 0 : index
    %c0_0 = arith.constant 0 : index
    %0 = vector.load %arg2[%c0, %c0_0] : memref<32x4xbf16, #tpu.memory_space<vmem>>, vector<32x4xbf16>
    %c0_1 = arith.constant 0 : index
    %c0_2 = arith.constant 0 : index
    %1 = vector.load %arg1[%c0_1, %c0_2] : memref<4x8xbf16, #tpu.memory_space<vmem>>, vector<4x8xbf16>
    %cst = arith.constant dense<0.000000e+00> : vector<32x8xf32>
    %2 = tpu.matmul %0, %1, %cst {dimension_numbers = #tpu.dot_dimension_numbers<[1], [0], [0], [1], [0, 0, 1, 1], [], []>} : vector<32x4xbf16>, vector<4x8xbf16>, vector<32x8xf32> -> vector<32x8xf32>
    %c0_3 = arith.constant 0 : index
    %c0_4 = arith.constant 0 : index
    %3 = vector.load %arg3[%c0_3, %c0_4] : memref<32x1xf32, #tpu.memory_space<vmem>>, vector<32x1xf32>
    %4 = vector.broadcast %3 : vector<32x1xf32> to vector<32x8xf32>
    %5 = arith.addf %2, %4 : vector<32x8xf32>
    %cst_5 = arith.constant 0.000000e+00 : f32
    %6 = vector.broadcast %cst_5 : f32 to vector<32x8xf32>
    %7 = arith.maximumf %5, %6 : vector<32x8xf32>
    %8 = arith.truncf %7 : vector<32x8xf32> to vector<32x8xbf16>
    %c0_6 = arith.constant 0 : index
    %c0_7 = arith.constant 0 : index
    %9 = vector.load %arg4[%c0_6, %c0_7] : memref<64x32xbf16, #tpu.memory_space<vmem>>, vector<64x32xbf16>
    %cst_8 = arith.constant dense<0.000000e+00> : vector<64x8xf32>
    %10 = tpu.matmul %9, %8, %cst_8 {dimension_numbers = #tpu.dot_dimension_numbers<[1], [0], [0], [1], [0, 0, 1, 1], [], []>} : vector<64x32xbf16>, vector<32x8xbf16>, vector<64x8xf32> -> vector<64x8xf32>
    %c0_9 = arith.constant 0 : index
    %c0_10 = arith.constant 0 : index
    %11 = vector.load %arg5[%c0_9, %c0_10] : memref<64x1xf32, #tpu.memory_space<vmem>>, vector<64x1xf32>
    %12 = vector.broadcast %11 : vector<64x1xf32> to vector<64x8xf32>
    %13 = arith.addf %10, %12 : vector<64x8xf32>
    %cst_11 = arith.constant 0.000000e+00 : f32
    %14 = vector.broadcast %cst_11 : f32 to vector<64x8xf32>
    %15 = arith.maximumf %13, %14 : vector<64x8xf32>
    %16 = arith.truncf %15 : vector<64x8xf32> to vector<64x8xbf16>
    %c0_12 = arith.constant 0 : index
    %c0_13 = arith.constant 0 : index
    %17 = vector.load %arg6[%c0_12, %c0_13] : memref<32x64xbf16, #tpu.memory_space<vmem>>, vector<32x64xbf16>
    %cst_14 = arith.constant dense<0.000000e+00> : vector<32x8xf32>
    %18 = tpu.matmul %17, %16, %cst_14 {dimension_numbers = #tpu.dot_dimension_numbers<[1], [0], [0], [1], [0, 0, 1, 1], [], []>} : vector<32x64xbf16>, vector<64x8xbf16>, vector<32x8xf32> -> vector<32x8xf32>
    %c0_15 = arith.constant 0 : index
    %c0_16 = arith.constant 0 : index
    %19 = vector.load %arg7[%c0_15, %c0_16] : memref<32x1xf32, #tpu.memory_space<vmem>>, vector<32x1xf32>
    %20 = vector.broadcast %19 : vector<32x1xf32> to vector<32x8xf32>
    %21 = arith.addf %18, %20 : vector<32x8xf32>
    %cst_17 = arith.constant 0.000000e+00 : f32
    %22 = vector.broadcast %cst_17 : f32 to vector<32x8xf32>
    %23 = arith.maximumf %21, %22 : vector<32x8xf32>
    %24 = arith.truncf %23 : vector<32x8xf32> to vector<32x8xbf16>
    %c0_18 = arith.constant 0 : index
    %c0_19 = arith.constant 0 : index
    %25 = vector.load %arg8[%c0_18, %c0_19] : memref<1x32xbf16, #tpu.memory_space<vmem>>, vector<1x32xbf16>
    %cst_20 = arith.constant dense<0.000000e+00> : vector<1x8xf32>
    %26 = tpu.matmul %25, %24, %cst_20 {dimension_numbers = #tpu.dot_dimension_numbers<[1], [0], [0], [1], [0, 0, 1, 1], [], []>} : vector<1x32xbf16>, vector<32x8xbf16>, vector<1x8xf32> -> vector<1x8xf32>
    %c0_21 = arith.constant 0 : index
    %c0_22 = arith.constant 0 : index
    %27 = vector.load %arg9[%c0_21, %c0_22] : memref<1x1xf32, #tpu.memory_space<vmem>>, vector<1x1xf32>
    %28 = vector.broadcast %27 : vector<1x1xf32> to vector<1x8xf32>
    %29 = arith.addf %26, %28 : vector<1x8xf32>
    %c0_23 = arith.constant 0 : index
    %c0_24 = arith.constant 0 : index
    %30 = vector.load %arg10[%c0_23, %c0_24] : memref<1x8xf32, #tpu.memory_space<vmem>>, vector<1x8xf32>
    tpu.vector_store %arg10[%c0_23, %c0_24], %29 {strides = array<i32>} : memref<1x8xf32, #tpu.memory_space<vmem>>, vector<1x8xf32>,
    return
  }
  func.func @transform_0(%arg0: i32) -> (i32, i32) {
    %c0_i32 = arith.constant 0 : i32
    %c0_i32_0 = arith.constant 0 : i32
    return %c0_i32, %arg0 : i32, i32
  }
  func.func @transform_1(%arg0: i32) -> (i32, i32) {
    %c0_i32 = arith.constant 0 : i32
    %c0_i32_0 = arith.constant 0 : i32
    %c0_i32_1 = arith.constant 0 : i32
    return %c0_i32, %c0_i32_0 : i32, i32
  }
  func.func @transform_2(%arg0: i32) -> (i32, i32) {
    %c0_i32 = arith.constant 0 : i32
    %c0_i32_0 = arith.constant 0 : i32
    %c0_i32_1 = arith.constant 0 : i32
    return %c0_i32, %c0_i32_0 : i32, i32
  }
  func.func @transform_3(%arg0: i32) -> (i32, i32) {
    %c0_i32 = arith.constant 0 : i32
    %c0_i32_0 = arith.constant 0 : i32
    %c0_i32_1 = arith.constant 0 : i32
    return %c0_i32, %c0_i32_0 : i32, i32
  }
  func.func @transform_4(%arg0: i32) -> (i32, i32) {
    %c0_i32 = arith.constant 0 : i32
    %c0_i32_0 = arith.constant 0 : i32
    %c0_i32_1 = arith.constant 0 : i32
    return %c0_i32, %c0_i32_0 : i32, i32
  }
  func.func @transform_5(%arg0: i32) -> (i32, i32) {
    %c0_i32 = arith.constant 0 : i32
    %c0_i32_0 = arith.constant 0 : i32
    %c0_i32_1 = arith.constant 0 : i32
    return %c0_i32, %c0_i32_0 : i32, i32
  }
  func.func @transform_6(%arg0: i32) -> (i32, i32) {
    %c0_i32 = arith.constant 0 : i32
    %c0_i32_0 = arith.constant 0 : i32
    %c0_i32_1 = arith.constant 0 : i32
    return %c0_i32, %c0_i32_0 : i32, i32
  }
  func.func @transform_7(%arg0: i32) -> (i32, i32) {
    %c0_i32 = arith.constant 0 : i32
    %c0_i32_0 = arith.constant 0 : i32
    %c0_i32_1 = arith.constant 0 : i32
    return %c0_i32, %c0_i32_0 : i32, i32
  }
  func.func @transform_8(%arg0: i32) -> (i32, i32) {
    %c0_i32 = arith.constant 0 : i32
    %c0_i32_0 = arith.constant 0 : i32
    %c0_i32_1 = arith.constant 0 : i32
    return %c0_i32, %c0_i32_0 : i32, i32
  }
  func.func @transform_9(%arg0: i32) -> (i32, i32) {
    %c0_i32 = arith.constant 0 : i32
    %c0_i32_0 = arith.constant 0 : i32
    return %c0_i32, %arg0 : i32, i32
  }
}

</mosaic_0001>

<llo_original>
// kernel: tpu_custom_call.1
$region0: #{tpu_custom_call.1}
  #allocation0 [shape = 'u32[]', space=smem, size = 0x4, offset = 0x4, fixed_abs, tag = 'smem constant byte address 0x4 - core index']
  #allocation1 [shape = 'u32[72,128]{1,0:T(1,128)}', space=vmem, size = 0x9000, scoped, tag = 'internal scratch']
  #allocation2 [shape = 'f32[1,1]{1,0:T(1,128)S(1)}', space=vmem, size = 0x200, scoped, tag = 'scoped memory for tpu_custom_call.1']
  %s0 = inlined_call_operand.vmem [shape: bf16[4,8], index: 0, kind: input, shape index: {}]
  %s1 = inlined_call_operand.vmem [shape: bf16[32,4], index: 1, kind: input, shape index: {}]
  %s2 = inlined_call_operand.vmem [shape: f32[32,1], index: 2, kind: input, shape index: {}]
  %s3 = inlined_call_operand.vmem [shape: bf16[64,32], index: 3, kind: input, shape index: {}]
  %s4 = inlined_call_operand.vmem [shape: f32[64,1], index: 4, kind: input, shape index: {}]
  %s5 = inlined_call_operand.vmem [shape: bf16[32,64], index: 5, kind: input, shape index: {}]
  %s6 = inlined_call_operand.vmem [shape: f32[32,1], index: 6, kind: input, shape index: {}]
  %s7 = inlined_call_operand.vmem [shape: bf16[1,32], index: 7, kind: input, shape index: {}]
  %s8 = inlined_call_operand.<no memory space> [shape: f32[1,1], index: 8, kind: input, shape index: {}]
  %s9 = inlined_call_operand.hbm [shape: f32[1,8], index: 9, kind: output, shape index: {}]
  %s10 = sld [smem:[#allocation0]]
  $region46: #{tpu_custom_call.1} parent=0
    _
  %s12 = ssub.s32 1, %s10
  %s13 = scalar_select 0, %s12, %s10
  %v14 = vstv %s8
  %15 = vst [vmem:[#allocation2] sm:$0x1] %v14
  $region1: #{tpu_custom_call.1} parent=0
    #allocation3 [shape = 'u8[512]{0}', space=vmem, size = 0x400, scoped, tag = 'output window, operand 0, single buffered']
    #allocation4 [shape = 's32[1]{0}', space=sflag, size = 0x4, scoped, tag = 'scoped memory for tpu_custom_call.1']
    %16 = vsyncpa [#allocation4], 0
    // Predicated region
    $region2: #{tpu_custom_call.1} parent=1 // pred_check
      _
    $region3: #{tpu_custom_call.1} parent=1 // pred_check_branch
      %18 = sbr.rel (0) target = $region5
    $region4: #{tpu_custom_call.1} parent=1 // pred_region
      _
    $region5: #{tpu_custom_call.1} parent=1 // pred_fallthru
      _
    // Predicated region
    $region6: #{tpu_custom_call.1} parent=1 // pred_check
      _
    $region7: #{tpu_custom_call.1} parent=1 // pred_check_branch
      %20 = sbr.rel (0) target = $region9
    $region8: #{tpu_custom_call.1} parent=1 // pred_region
      _
    $region9: #{tpu_custom_call.1} parent=1 // pred_fallthru
      _
    // Predicated region
    $region10: #{tpu_custom_call.1} parent=1 // pred_check
      _
    $region11: #{tpu_custom_call.1} parent=1 // pred_check_branch
      %22 = sbr.rel (0) target = $region13
    $region12: #{tpu_custom_call.1} parent=1 // pred_region
      _
    $region13: #{tpu_custom_call.1} parent=1 // pred_fallthru
      _
    // Predicated region
    $region14: #{tpu_custom_call.1} parent=1 // pred_check
      _
    $region15: #{tpu_custom_call.1} parent=1 // pred_check_branch
      %24 = sbr.rel (0) target = $region17
    $region16: #{tpu_custom_call.1} parent=1 // pred_region
      _
    $region17: #{tpu_custom_call.1} parent=1 // pred_fallthru
      _
    // Predicated region
    $region18: #{tpu_custom_call.1} parent=1 // pred_check
      _
    $region19: #{tpu_custom_call.1} parent=1 // pred_check_branch
      %26 = sbr.rel (0) target = $region21
    $region20: #{tpu_custom_call.1} parent=1 // pred_region
      _
    $region21: #{tpu_custom_call.1} parent=1 // pred_fallthru
      _
    // Predicated region
    $region22: #{tpu_custom_call.1} parent=1 // pred_check
      _
    $region23: #{tpu_custom_call.1} parent=1 // pred_check_branch
      %28 = sbr.rel (0) target = $region25
    $region24: #{tpu_custom_call.1} parent=1 // pred_region
      _
    $region25: #{tpu_custom_call.1} parent=1 // pred_fallthru
      _
    // Predicated region
    $region26: #{tpu_custom_call.1} parent=1 // pred_check
      _
    $region27: #{tpu_custom_call.1} parent=1 // pred_check_branch
      %30 = sbr.rel (0) target = $region29
    $region28: #{tpu_custom_call.1} parent=1 // pred_region
      _
    $region29: #{tpu_custom_call.1} parent=1 // pred_fallthru
      _
    // Predicated region
    $region30: #{tpu_custom_call.1} parent=1 // pred_check
      _
    $region31: #{tpu_custom_call.1} parent=1 // pred_check_branch
      %32 = sbr.rel (0) target = $region33
    $region32: #{tpu_custom_call.1} parent=1 // pred_region
      _
    $region33: #{tpu_custom_call.1} parent=1 // pred_fallthru
      _
    // Predicated region
    $region34: #{tpu_custom_call.1} parent=1 // pred_check
      _
    $region35: #{tpu_custom_call.1} parent=1 // pred_check_branch
      %34 = sbr.rel (0) target = $region37
    $region36: #{tpu_custom_call.1} parent=1 // pred_region
      _
    $region37: #{tpu_custom_call.1} parent=1 // pred_fallthru
      _
    %v36 = vld [vmem:[%s1] sm:$0xf]
    %v37 = vld [vmem:[%s1 + $0x4] sm:$0xf]
    %v38 = vld [vmem:[%s1 + $0x8] sm:$0xf]
    %v39 = vld [vmem:[%s1 + $0xc] sm:$0xf]
    %v40 = vld [vmem:[%s0] sm:$0x3]
    %v41 = vld [vmem:[%s2] sm:$0xff]
    %v42 = vld [vmem:[%s2 + $0x8] sm:$0xff]
    %v43 = vld [vmem:[%s2 + $0x10] sm:$0xff]
    %v44 = vld [vmem:[%s2 + $0x18] sm:$0xff]
    %46 = vset.pattern.permute.xlu0 0
    %47 = vperm.xlu0 %46, %v41
    %v48 = vpop.permute.xlu0 %47
    %51 = vset.pattern.permute.xlu0 0
    %52 = vperm.xlu0 %51, %v42
    %v53 = vpop.permute.xlu0 %52
    %56 = vset.pattern.permute.xlu0 0
    %57 = vperm.xlu0 %56, %v43
    %v58 = vpop.permute.xlu0 %57
    %61 = vset.pattern.permute.xlu0 0
    %62 = vperm.xlu0 %61, %v44
    %v63 = vpop.permute.xlu0 %62
    %v69 = vunpack.c.l.b16 %v36
    %v70 = vunpack.c.l.b16 %v37
    %v71 = vunpack.c.l.b16 %v38
    %v72 = vunpack.c.l.b16 %v39
    %v73 = vpack.c.b16 %v70, %v69
    %v74 = vpack.c.b16 %v72, %v71
    %vm75 = vcmask 31744
    %v77 = vsel %vm75, %v73, 0
    %v80 = vsel %vm75, %v74, 0
    %vm82 = vcmask 1041408
    %v84 = vsel %vm82, %v40, 0
    %86 = vmatpush.bf16.msra.mxu0 0
    %87 = vmatpush.bf16.msra.mxu0 0
    %88 = vmatpush.bf16.msra.mxu0 0
    %89 = vmatpush.bf16.msra.mxu0 0
    %90 = vmatpush.bf16.msra.mxu0 0
    %91 = vmatpush.bf16.msra.mxu0 0
    %92 = vmatpush.bf16.msra.mxu0 0
    %93 = vmatpush.bf16.msra.mxu0 %v84
    %94 = vmatmul.bf16.gmra.mxu0 %v77
    %v95 = vpop.f32.mrf.mxu0
    %v96 = vadd.f32 %v48, %v95
    %v97 = vpop.f32.mrf.mxu0
    %v98 = vadd.f32 %v53, %v97
    %99 = vmatmul.bf16.gmra.mxu0 %v80
    %v100 = vpop.f32.mrf.mxu0
    %v101 = vadd.f32 %v58, %v100
    %v102 = vpop.f32.mrf.mxu0
    %v103 = vadd.f32 %v63, %v102
    %104 = vdwg.mxu0
    %v105 = vmax.f32 %v96, 0.0
    %v106 = vmax.f32 %v98, 0.0
    %v107 = vmax.f32 %v101, 0.0
    %v108 = vmax.f32 %v103, 0.0
    %v109 = vpack.c.bf16 %v106, %v105
    %v110 = vpack.c.bf16 %v108, %v107
    %v111 = vld [vmem:[%s3] sm:$0xf]
    %v112 = vld [vmem:[%s3 + $0x4] sm:$0xf]
    %v113 = vld [vmem:[%s3 + $0x8] sm:$0xf]
    %v114 = vld [vmem:[%s3 + $0xc] sm:$0xf]
    %v115 = vld [vmem:[%s3 + $0x10] sm:$0xf]
    %v116 = vld [vmem:[%s3 + $0x14] sm:$0xf]
    %v117 = vld [vmem:[%s3 + $0x18] sm:$0xf]
    %v118 = vld [vmem:[%s3 + $0x1c] sm:$0xf]
    %v119 = vld [vmem:[%s4] sm:$0xff]
    %v120 = vld [vmem:[%s4 + $0x8] sm:$0xff]
    %v121 = vld [vmem:[%s4 + $0x10] sm:$0xff]
    %v122 = vld [vmem:[%s4 + $0x18] sm:$0xff]
    %v123 = vld [vmem:[%s4 + $0x20] sm:$0xff]
    %v124 = vld [vmem:[%s4 + $0x28] sm:$0xff]
    %v125 = vld [vmem:[%s4 + $0x30] sm:$0xff]
    %v126 = vld [vmem:[%s4 + $0x38] sm:$0xff]
    %128 = vset.pattern.permute.xlu0 0
    %129 = vperm.xlu0 %128, %v119
    %v130 = vpop.permute.xlu0 %129
    %133 = vset.pattern.permute.xlu0 0
    %134 = vperm.xlu0 %133, %v120
    %v135 = vpop.permute.xlu0 %134
    %138 = vset.pattern.permute.xlu0 0
    %139 = vperm.xlu0 %138, %v121
    %v140 = vpop.permute.xlu0 %139
    %143 = vset.pattern.permute.xlu0 0
    %144 = vperm.xlu0 %143, %v122
    %v145 = vpop.permute.xlu0 %144
    %148 = vset.pattern.permute.xlu0 0
    %149 = vperm.xlu0 %148, %v123
    %v150 = vpop.permute.xlu0 %149
    %153 = vset.pattern.permute.xlu0 0
    %154 = vperm.xlu0 %153, %v124
    %v155 = vpop.permute.xlu0 %154
    %158 = vset.pattern.permute.xlu0 0
    %159 = vperm.xlu0 %158, %v125
    %v160 = vpop.permute.xlu0 %159
    %163 = vset.pattern.permute.xlu0 0
    %164 = vperm.xlu0 %163, %v126
    %v165 = vpop.permute.xlu0 %164
    %v175 = vunpack.c.l.b16 %v111
    %v176 = vunpack.c.l.b16 %v112
    %v177 = vunpack.c.l.b16 %v113
    %v178 = vunpack.c.l.b16 %v114
    %v179 = vunpack.c.l.b16 %v115
    %v180 = vunpack.c.l.b16 %v116
    %v181 = vunpack.c.l.b16 %v117
    %v182 = vunpack.c.l.b16 %v118
    %v183 = vpack.c.b16 %v176, %v175
    %v184 = vpack.c.b16 %v178, %v177
    %v185 = vpack.c.b16 %v180, %v179
    %v186 = vpack.c.b16 %v182, %v181
    %vm187 = vcmask 261120
    %v189 = vsel %vm187, %v183, 0
    %v192 = vsel %vm187, %v184, 0
    %v195 = vsel %vm187, %v185, 0
    %v198 = vsel %vm187, %v186, 0
    %200 = vmatpush.bf16.msra.mxu0 0
    %201 = vmatpush.bf16.msra.mxu0 0
    %202 = vmatpush.bf16.msra.mxu0 0
    %203 = vmatpush.bf16.msra.mxu0 0
    %204 = vmatpush.bf16.msra.mxu0 0
    %205 = vmatpush.bf16.msra.mxu0 0
    %206 = vmatpush.bf16.msra.mxu0 %v110
    %207 = vmatpush.bf16.msra.mxu0 %v109
    %208 = vmatmul.bf16.gmra.mxu0 %v189
    %v209 = vpop.f32.mrf.mxu0
    %v210 = vadd.f32 %v130, %v209
    %v211 = vpop.f32.mrf.mxu0
    %v212 = vadd.f32 %v135, %v211
    %213 = vmatmul.bf16.gmra.mxu0 %v192
    %v214 = vpop.f32.mrf.mxu0
    %v215 = vadd.f32 %v140, %v214
    %v216 = vpop.f32.mrf.mxu0
    %v217 = vadd.f32 %v145, %v216
    %218 = vmatmul.bf16.gmra.mxu0 %v195
    %v219 = vpop.f32.mrf.mxu0
    %v220 = vadd.f32 %v150, %v219
    %v221 = vpop.f32.mrf.mxu0
    %v222 = vadd.f32 %v155, %v221
    %223 = vmatmul.bf16.gmra.mxu0 %v198
    %v224 = vpop.f32.mrf.mxu0
    %v225 = vadd.f32 %v160, %v224
    %v226 = vpop.f32.mrf.mxu0
    %v227 = vadd.f32 %v165, %v226
    %228 = vdwg.mxu0
    %v229 = vmax.f32 %v210, 0.0
    %v230 = vmax.f32 %v212, 0.0
    %v231 = vmax.f32 %v215, 0.0
    %v232 = vmax.f32 %v217, 0.0
    %v233 = vmax.f32 %v220, 0.0
    %v234 = vmax.f32 %v222, 0.0
    %v235 = vmax.f32 %v225, 0.0
    %v236 = vmax.f32 %v227, 0.0
    %v237 = vpack.c.bf16 %v230, %v229
    %v238 = vpack.c.bf16 %v232, %v231
    %v239 = vpack.c.bf16 %v234, %v233
    %v240 = vpack.c.bf16 %v236, %v235
    %v241 = vld [vmem:[%s5] sm:$0xf]
    %v242 = vld [vmem:[%s5 + $0x4] sm:$0xf]
    %v243 = vld [vmem:[%s5 + $0x8] sm:$0xf]
    %v244 = vld [vmem:[%s5 + $0xc] sm:$0xf]
    %v245 = vld [vmem:[%s6] sm:$0xff]
    %v246 = vld [vmem:[%s6 + $0x8] sm:$0xff]
    %v247 = vld [vmem:[%s6 + $0x10] sm:$0xff]
    %v248 = vld [vmem:[%s6 + $0x18] sm:$0xff]
    %250 = vset.pattern.permute.xlu0 0
    %251 = vperm.xlu0 %250, %v245
    %v252 = vpop.permute.xlu0 %251
    %255 = vset.pattern.permute.xlu0 0
    %256 = vperm.xlu0 %255, %v246
    %v257 = vpop.permute.xlu0 %256
    %260 = vset.pattern.permute.xlu0 0
    %261 = vperm.xlu0 %260, %v247
    %v262 = vpop.permute.xlu0 %261
    %265 = vset.pattern.permute.xlu0 0
    %266 = vperm.xlu0 %265, %v248
    %v267 = vpop.permute.xlu0 %266
    %v273 = vunpack.c.l.b16 %v241
    %v274 = vunpack.c.l.b16 %v242
    %v275 = vunpack.c.l.b16 %v243
    %v276 = vunpack.c.l.b16 %v244
    %v277 = vpack.c.b16 %v274, %v273
    %v278 = vpack.c.b16 %v276, %v275
    %vm279 = vcmask 523264
    %v281 = vsel %vm279, %v277, 0
    %v284 = vsel %vm279, %v278, 0
    %286 = vmatpush.bf16.msra.mxu0 0
    %287 = vmatpush.bf16.msra.mxu0 0
    %288 = vmatpush.bf16.msra.mxu0 0
    %289 = vmatpush.bf16.msra.mxu0 0
    %290 = vmatpush.bf16.msra.mxu0 %v240
    %291 = vmatpush.bf16.msra.mxu0 %v239
    %292 = vmatpush.bf16.msra.mxu0 %v238
    %293 = vmatpush.bf16.msra.mxu0 %v237
    %294 = vmatmul.bf16.gmra.mxu0 %v281
    %v295 = vpop.f32.mrf.mxu0
    %v296 = vadd.f32 %v252, %v295
    %v297 = vpop.f32.mrf.mxu0
    %v298 = vadd.f32 %v257, %v297
    %299 = vmatmul.bf16.gmra.mxu0 %v284
    %v300 = vpop.f32.mrf.mxu0
    %v301 = vadd.f32 %v262, %v300
    %v302 = vpop.f32.mrf.mxu0
    %v303 = vadd.f32 %v267, %v302
    %304 = vdwg.mxu0
    %v305 = vmax.f32 %v296, 0.0
    %v306 = vmax.f32 %v298, 0.0
    %v307 = vmax.f32 %v301, 0.0
    %v308 = vmax.f32 %v303, 0.0
    %v309 = vpack.c.bf16 %v306, %v305
    %v310 = vpack.c.bf16 %v308, %v307
    %v311 = vld [vmem:[%s7] sm:$0x1]
    %v312 = vld [vmem:[#allocation2] sm:$0x1]
    %314 = vset.pattern.permute.xlu0 0
    %315 = vperm.xlu0 %314, %v312
    %v316 = vpop.permute.xlu0 %315
    %v318 = vperm.slane %v316, 0
    %v320 = vsel %vm187, %v311, 0
    %322 = vmatpush.bf16.msra.mxu0 0
    %323 = vmatpush.bf16.msra.mxu0 0
    %324 = vmatpush.bf16.msra.mxu0 0
    %325 = vmatpush.bf16.msra.mxu0 0
    %326 = vmatpush.bf16.msra.mxu0 0
    %327 = vmatpush.bf16.msra.mxu0 0
    %328 = vmatpush.bf16.msra.mxu0 %v310
    %329 = vmatpush.bf16.msra.mxu0 %v309
    %330 = vmatmul.bf16.gmra.mxu0 %v320
    %v331 = vpop.f32.mrf.mxu0
    %v332 = vadd.f32 %v318, %v331
    %v333 = vpop.f32.mrf.mxu0
    %334 = vdwg.mxu0
    %vm335 = vcmask 57344
    %336 = vst.msk [vmem:[#allocation3] sm:$0x1] %vm335, %v332
    // Predicated region
    $region38: #{tpu_custom_call.1} parent=1 // pred_check
      _
    $region39: #{tpu_custom_call.1} parent=1 // pred_check_branch
      %338 = sbr.rel (0) target = $region41
    $region40: #{tpu_custom_call.1} parent=1 // pred_region
      %340 = vsyncadd [#allocation4], 0
      %s342 = sshll.u32 [#allocation3], 4
      %s343 = int_to_ptr.vmem [resolvable:$true] %s342
      %s344 = sshll.u32 %s9, 4
      %s345 = int_to_ptr.hbm [resolvable:$true] %s344
      %347 = dma.vmem_to_hbm [thread:$0]  %s343, 16, %s345, [#allocation4]
    $region41: #{tpu_custom_call.1} parent=1 // pred_fallthru
      _
    // Predicated region
    $region42: #{tpu_custom_call.1} parent=1 // pred_check
      _
    $region43: #{tpu_custom_call.1} parent=1 // pred_check_branch
      %349 = sbr.rel (0) target = $region45
    $region44: #{tpu_custom_call.1} parent=1 // pred_region
      %351 = dma.done [#allocation4], 16
    $region45: #{tpu_custom_call.1} parent=1 // pred_fallthru
      _
    %352 = vsyncpa [#allocation4], 1

</llo_original>
